<compile_context>
chip_gen: v7x
topology: tpu7x:2x2x1
jax: 0.10.0
libtpu: 0.0.40
codegen_flags: <defaults>
</compile_context>

<pallas_src>
import functools

import jax
import jax.numpy as jnp
from jax.experimental import pallas as pl
from jax.experimental.pallas import tpu as pltpu

_LANE = 128


def _mlp_kernel(x_ref,
                w1_ref, b1_ref,
                w2_ref, b2_ref,
                w3_ref, b3_ref,
                w4_ref, b4_ref,
                o_ref):
    """Fused 4-layer MLP on one (TB, state_dim) batch tile."""
    x = x_ref[...]  # f32 (TB, state_dim)

    # fc1 (f32 weights, tiny) + ReLU
    h = jnp.dot(x, w1_ref[...], preferred_element_type=jnp.float32) + b1_ref[...]
    h = jnp.maximum(h, 0.0)

    # fc2 (bf16 weights, f32 accumulation) + ReLU
    h = jnp.dot(h.astype(jnp.bfloat16), w2_ref[...],
                preferred_element_type=jnp.float32) + b2_ref[...]
    h = jnp.maximum(h, 0.0)

    # fc3 (bf16 weights, f32 accumulation) + ReLU
    h = jnp.dot(h.astype(jnp.bfloat16), w3_ref[...],
                preferred_element_type=jnp.float32) + b3_ref[...]
    h = jnp.maximum(h, 0.0)

    # fc4 (f32 weights, output columns padded to 128 lanes)
    out = jnp.dot(h, w4_ref[...], preferred_element_type=jnp.float32) + b4_ref[...]
    o_ref[...] = out


def fully_connected_forward(x, params, *, batch_tile=None):
    """x: (B, state_dim) float32. params: dict w1..w4, b1..b4 (see init_params)."""
    B, state_dim = x.shape
    action_dim = params["w4"].shape[1]

    # --- lane-dense output: pad final layer to 128 output columns -----------
    padded_adim = max(_LANE, pl.cdiv(action_dim, _LANE) * _LANE)
    w4 = params["w4"]
    b4 = params["b4"]
    if padded_adim != action_dim:
        w4 = jnp.pad(w4, ((0, 0), (0, padded_adim - action_dim)))
        b4 = jnp.pad(b4, ((0, 0), (0, padded_adim - action_dim)))

    # --- batch tiling --------------------------------------------------------
    if batch_tile is None:
        # 256 rows fully occupy the 256x256 MXU (v6e/v7x); small batches are
        # padded up to a multiple of 8 and handled in one tile.
        batch_tile = 256 if B >= 256 else max(8, pl.cdiv(B, 8) * 8)
    TB = batch_tile
    num_tiles = pl.cdiv(B, TB)
    padded_B = num_tiles * TB
    if padded_B != B:
        x = jnp.pad(x, ((0, padded_B - B), (0, 0)))

    in_specs = [
        pl.BlockSpec((TB, state_dim), lambda i: (i, 0)),          # x: tiled over batch
        pl.BlockSpec(params["w1"].shape, lambda i: (0, 0)),       # weights/biases:
        pl.BlockSpec(params["b1"].shape, lambda i: (0, 0)),       # constant index_map
        pl.BlockSpec(params["w2"].shape, lambda i: (0, 0)),       # -> DMA'd once,
        pl.BlockSpec(params["b2"].shape, lambda i: (0, 0)),       # resident in VMEM
        pl.BlockSpec(params["w3"].shape, lambda i: (0, 0)),
        pl.BlockSpec(params["b3"].shape, lambda i: (0, 0)),
        pl.BlockSpec(w4.shape, lambda i: (0, 0)),
        pl.BlockSpec(b4.shape, lambda i: (0, 0)),
    ]
    out_specs = pl.BlockSpec((TB, padded_adim), lambda i: (i, 0))

    out = pl.pallas_call(
        _mlp_kernel,
        out_shape=jax.ShapeDtypeStruct((padded_B, padded_adim), jnp.float32),
        grid=(num_tiles,),
        in_specs=in_specs,
        out_specs=out_specs,
        compiler_params=pltpu.CompilerParams(
            dimension_semantics=("parallel",)),  # megacore sharding on v7x
    )(x,
      params["w1"], params["b1"],
      params["w2"], params["b2"],
      params["w3"], params["b3"],
      w4, b4)

    return out[:B, :action_dim]


# ----------------------------- init & reference -----------------------------

def _xavier_uniform(key, fan_in, fan_out, dtype=jnp.float32):
    # matches torch.nn.init.xavier_uniform_ (gain=1)
    limit = jnp.sqrt(6.0 / (fan_in + fan_out))
    return jax.random.uniform(key, (fan_in, fan_out), jnp.float32,
                              minval=-limit, maxval=limit).astype(dtype)


def _linear_bias_default(key, fan_in, fan_out):
    # matches nn.Linear default bias init: U(-1/sqrt(fan_in), 1/sqrt(fan_in))
    bound = 1.0 / jnp.sqrt(jnp.float32(fan_in))
    return jax.random.uniform(key, (1, fan_out), jnp.float32,
                              minval=-bound, maxval=bound)


def init_params(key, state_dim, action_dim):
    # w2/w3 stored in bf16 (dominant HBM traffic); everything else f32.
    dims = [(state_dim, 256, jnp.float32),
            (256, 512, jnp.bfloat16),
            (512, 256, jnp.bfloat16),
            (256, action_dim, jnp.float32)]
    keys = jax.random.split(key, 8)
    params = {}
    for i, (fi, fo, wdt) in enumerate(dims, start=1):
        params[f"w{i}"] = _xavier_uniform(keys[2 * (i - 1)], fi, fo, wdt)
        params[f"b{i}"] = _linear_bias_default(keys[2 * (i - 1) + 1], fi, fo)
    return params


def reference_forward(x, params):
    """Pure-JAX reference using the same mixed-precision recipe as the kernel."""
    h = jnp.maximum(
        jnp.dot(x, params["w1"], preferred_element_type=jnp.float32) + params["b1"], 0.0)
    h = jnp.maximum(
        jnp.dot(h.astype(jnp.bfloat16), params["w2"],
                preferred_element_type=jnp.float32) + params["b2"], 0.0)
    h = jnp.maximum(
        jnp.dot(h.astype(jnp.bfloat16), params["w3"],
                preferred_element_type=jnp.float32) + params["b3"], 0.0)
    return jnp.dot(h, params["w4"], preferred_element_type=jnp.float32) + params["b4"]


if __name__ == "__main__":
    key = jax.random.PRNGKey(0)
    k_param, k_x_small, k_x_big = jax.random.split(key, 3)

    state_dim = 8      # small RL state vector (LunarLander-like)
    action_dim = 4

    params = init_params(k_param, state_dim, action_dim)

    # Small inference-style batch (padded to one 8-row tile inside the wrapper).
    x_small = jax.random.normal(k_x_small, (2, state_dim), dtype=jnp.float32)
    out_small = jax.block_until_ready(fully_connected_forward(x_small, params))
    ref_small = reference_forward(x_small, params)
    assert out_small.shape == (2, action_dim)
    assert jnp.allclose(out_small, ref_small, atol=1e-2, rtol=1e-2)

    # Training-style batch: exercises the 256-row tiles, resident weights and
    # the parallel batch grid (2 grid steps).
    x_big = jax.random.normal(k_x_big, (512, state_dim), dtype=jnp.float32)
    out_big = jax.block_until_ready(fully_connected_forward(x_big, params))
    ref_big = reference_forward(x_big, params)
    assert out_big.shape == (512, action_dim)
    assert jnp.allclose(out_big, ref_big, atol=1e-2, rtol=1e-2)

    print("KERNEL_OK")
</pallas_src>

<mosaic_0001>
module attributes {stable_mosaic.version = 11 : i64} {
  func.func @_mlp_kernel(%arg0: i32, %arg1: memref<8x8xf32, #tpu.memory_space<vmem>>, %arg2: memref<8x256xf32, #tpu.memory_space<vmem>>, %arg3: memref<1x256xf32, #tpu.memory_space<vmem>>, %arg4: memref<256x512xbf16, #tpu.memory_space<vmem>>, %arg5: memref<1x512xf32, #tpu.memory_space<vmem>>, %arg6: memref<512x256xbf16, #tpu.memory_space<vmem>>, %arg7: memref<1x256xf32, #tpu.memory_space<vmem>>, %arg8: memref<256x128xf32, #tpu.memory_space<vmem>>, %arg9: memref<1x128xf32, #tpu.memory_space<vmem>>, %arg10: memref<8x128xf32, #tpu.memory_space<vmem>>) attributes {dimension_semantics = [#tpu.dimension_semantics<parallel>], iteration_bounds = array<i64: 1>, scalar_prefetch = 0 : i64, scratch_operands = 0 : i64, tpu.core_type = #tpu.core_type<tc>, window_params = [{transform_indices = @transform_0, window_bounds = array<i64: 8, 8>}, {pipeline_mode = #tpu.pipeline_mode<synchronous>, transform_indices = @transform_1, window_bounds = array<i64: 8, 256>}, {pipeline_mode = #tpu.pipeline_mode<synchronous>, transform_indices = @transform_2, window_bounds = array<i64: 1, 256>}, {pipeline_mode = #tpu.pipeline_mode<synchronous>, transform_indices = @transform_3, window_bounds = array<i64: 256, 512>}, {pipeline_mode = #tpu.pipeline_mode<synchronous>, transform_indices = @transform_4, window_bounds = array<i64: 1, 512>}, {pipeline_mode = #tpu.pipeline_mode<synchronous>, transform_indices = @transform_5, window_bounds = array<i64: 512, 256>}, {pipeline_mode = #tpu.pipeline_mode<synchronous>, transform_indices = @transform_6, window_bounds = array<i64: 1, 256>}, {pipeline_mode = #tpu.pipeline_mode<synchronous>, transform_indices = @transform_7, window_bounds = array<i64: 256, 128>}, {pipeline_mode = #tpu.pipeline_mode<synchronous>, transform_indices = @transform_8, window_bounds = array<i64: 1, 128>}, {transform_indices = @transform_9, window_bounds = array<i64: 8, 128>}]} {
    %c0 = arith.constant 0 : index
    %c0_0 = arith.constant 0 : index
    %0 = vector.load %arg1[%c0, %c0_0] : memref<8x8xf32, #tpu.memory_space<vmem>>, vector<8x8xf32>
    %c0_1 = arith.constant 0 : index
    %c0_2 = arith.constant 0 : index
    %1 = vector.load %arg2[%c0_1, %c0_2] : memref<8x256xf32, #tpu.memory_space<vmem>>, vector<8x256xf32>
    %cst = arith.constant dense<0.000000e+00> : vector<8x256xf32>
    %2 = tpu.matmul %0, %1, %cst {dimension_numbers = #tpu.dot_dimension_numbers<[1], [0], [0], [1], [0, 0, 1, 1], [], []>} : vector<8x8xf32>, vector<8x256xf32>, vector<8x256xf32> -> vector<8x256xf32>
    %c0_3 = arith.constant 0 : index
    %c0_4 = arith.constant 0 : index
    %3 = vector.load %arg3[%c0_3, %c0_4] : memref<1x256xf32, #tpu.memory_space<vmem>>, vector<1x256xf32>
    %4 = vector.broadcast %3 : vector<1x256xf32> to vector<8x256xf32>
    %5 = arith.addf %2, %4 : vector<8x256xf32>
    %cst_5 = arith.constant 0.000000e+00 : f32
    %6 = vector.broadcast %cst_5 : f32 to vector<8x256xf32>
    %7 = arith.maximumf %5, %6 : vector<8x256xf32>
    %8 = arith.truncf %7 : vector<8x256xf32> to vector<8x256xbf16>
    %c0_6 = arith.constant 0 : index
    %c0_7 = arith.constant 0 : index
    %9 = vector.load %arg4[%c0_6, %c0_7] : memref<256x512xbf16, #tpu.memory_space<vmem>>, vector<256x512xbf16>
    %cst_8 = arith.constant dense<0.000000e+00> : vector<8x512xf32>
    %10 = tpu.matmul %8, %9, %cst_8 {dimension_numbers = #tpu.dot_dimension_numbers<[1], [0], [0], [1], [0, 0, 1, 1], [], []>} : vector<8x256xbf16>, vector<256x512xbf16>, vector<8x512xf32> -> vector<8x512xf32>
    %c0_9 = arith.constant 0 : index
    %c0_10 = arith.constant 0 : index
    %11 = vector.load %arg5[%c0_9, %c0_10] : memref<1x512xf32, #tpu.memory_space<vmem>>, vector<1x512xf32>
    %12 = vector.broadcast %11 : vector<1x512xf32> to vector<8x512xf32>
    %13 = arith.addf %10, %12 : vector<8x512xf32>
    %cst_11 = arith.constant 0.000000e+00 : f32
    %14 = vector.broadcast %cst_11 : f32 to vector<8x512xf32>
    %15 = arith.maximumf %13, %14 : vector<8x512xf32>
    %16 = arith.truncf %15 : vector<8x512xf32> to vector<8x512xbf16>
    %c0_12 = arith.constant 0 : index
    %c0_13 = arith.constant 0 : index
    %17 = vector.load %arg6[%c0_12, %c0_13] : memref<512x256xbf16, #tpu.memory_space<vmem>>, vector<512x256xbf16>
    %cst_14 = arith.constant dense<0.000000e+00> : vector<8x256xf32>
    %18 = tpu.matmul %16, %17, %cst_14 {dimension_numbers = #tpu.dot_dimension_numbers<[1], [0], [0], [1], [0, 0, 1, 1], [], []>} : vector<8x512xbf16>, vector<512x256xbf16>, vector<8x256xf32> -> vector<8x256xf32>
    %c0_15 = arith.constant 0 : index
    %c0_16 = arith.constant 0 : index
    %19 = vector.load %arg7[%c0_15, %c0_16] : memref<1x256xf32, #tpu.memory_space<vmem>>, vector<1x256xf32>
    %20 = vector.broadcast %19 : vector<1x256xf32> to vector<8x256xf32>
    %21 = arith.addf %18, %20 : vector<8x256xf32>
    %cst_17 = arith.constant 0.000000e+00 : f32
    %22 = vector.broadcast %cst_17 : f32 to vector<8x256xf32>
    %23 = arith.maximumf %21, %22 : vector<8x256xf32>
    %c0_18 = arith.constant 0 : index
    %c0_19 = arith.constant 0 : index
    %24 = vector.load %arg8[%c0_18, %c0_19] : memref<256x128xf32, #tpu.memory_space<vmem>>, vector<256x128xf32>
    %cst_20 = arith.constant dense<0.000000e+00> : vector<8x128xf32>
    %25 = tpu.matmul %23, %24, %cst_20 {dimension_numbers = #tpu.dot_dimension_numbers<[1], [0], [0], [1], [0, 0, 1, 1], [], []>} : vector<8x256xf32>, vector<256x128xf32>, vector<8x128xf32> -> vector<8x128xf32>
    %c0_21 = arith.constant 0 : index
    %c0_22 = arith.constant 0 : index
    %26 = vector.load %arg9[%c0_21, %c0_22] : memref<1x128xf32, #tpu.memory_space<vmem>>, vector<1x128xf32>
    %27 = vector.broadcast %26 : vector<1x128xf32> to vector<8x128xf32>
    %28 = arith.addf %25, %27 : vector<8x128xf32>
    %c0_23 = arith.constant 0 : index
    %c0_24 = arith.constant 0 : index
    %29 = vector.load %arg10[%c0_23, %c0_24] : memref<8x128xf32, #tpu.memory_space<vmem>>, vector<8x128xf32>
    tpu.vector_store %arg10[%c0_23, %c0_24], %28 {strides = array<i32>} : memref<8x128xf32, #tpu.memory_space<vmem>>, vector<8x128xf32>,
    return
  }
  func.func @transform_0(%arg0: i32) -> (i32, i32) {
    %c0_i32 = arith.constant 0 : i32
    %c0_i32_0 = arith.constant 0 : i32
    return %arg0, %c0_i32 : i32, i32
  }
  func.func @transform_1(%arg0: i32) -> (i32, i32) {
    %c0_i32 = arith.constant 0 : i32
    %c0_i32_0 = arith.constant 0 : i32
    %c0_i32_1 = arith.constant 0 : i32
    return %c0_i32, %c0_i32_0 : i32, i32
  }
  func.func @transform_2(%arg0: i32) -> (i32, i32) {
    %c0_i32 = arith.constant 0 : i32
    %c0_i32_0 = arith.constant 0 : i32
    %c0_i32_1 = arith.constant 0 : i32
    return %c0_i32, %c0_i32_0 : i32, i32
  }
  func.func @transform_3(%arg0: i32) -> (i32, i32) {
    %c0_i32 = arith.constant 0 : i32
    %c0_i32_0 = arith.constant 0 : i32
    %c0_i32_1 = arith.constant 0 : i32
    return %c0_i32, %c0_i32_0 : i32, i32
  }
  func.func @transform_4(%arg0: i32) -> (i32, i32) {
    %c0_i32 = arith.constant 0 : i32
    %c0_i32_0 = arith.constant 0 : i32
    %c0_i32_1 = arith.constant 0 : i32
    return %c0_i32, %c0_i32_0 : i32, i32
  }
  func.func @transform_5(%arg0: i32) -> (i32, i32) {
    %c0_i32 = arith.constant 0 : i32
    %c0_i32_0 = arith.constant 0 : i32
    %c0_i32_1 = arith.constant 0 : i32
    return %c0_i32, %c0_i32_0 : i32, i32
  }
  func.func @transform_6(%arg0: i32) -> (i32, i32) {
    %c0_i32 = arith.constant 0 : i32
    %c0_i32_0 = arith.constant 0 : i32
    %c0_i32_1 = arith.constant 0 : i32
    return %c0_i32, %c0_i32_0 : i32, i32
  }
  func.func @transform_7(%arg0: i32) -> (i32, i32) {
    %c0_i32 = arith.constant 0 : i32
    %c0_i32_0 = arith.constant 0 : i32
    %c0_i32_1 = arith.constant 0 : i32
    return %c0_i32, %c0_i32_0 : i32, i32
  }
  func.func @transform_8(%arg0: i32) -> (i32, i32) {
    %c0_i32 = arith.constant 0 : i32
    %c0_i32_0 = arith.constant 0 : i32
    %c0_i32_1 = arith.constant 0 : i32
    return %c0_i32, %c0_i32_0 : i32, i32
  }
  func.func @transform_9(%arg0: i32) -> (i32, i32) {
    %c0_i32 = arith.constant 0 : i32
    %c0_i32_0 = arith.constant 0 : i32
    return %arg0, %c0_i32 : i32, i32
  }
}

</mosaic_0001>

<llo_original>
// kernel: tpu_custom_call.1
$region0: #{tpu_custom_call.1}
  #allocation0 [shape = 'u32[]', space=smem, size = 0x4, offset = 0x4, fixed_abs, tag = 'smem constant byte address 0x4 - core index']
  #allocation1 [shape = 'u32[144,128]{1,0:T(1,128)}', space=vmem, size = 0x12000, scoped, tag = 'internal scratch']
  %s0 = inlined_call_operand.hbm [shape: f32[8,8], index: 0, kind: input, shape index: {}]
  %s1 = inlined_call_operand.hbm [shape: f32[8,256], index: 1, kind: input, shape index: {}]
  %s2 = inlined_call_operand.vmem [shape: f32[1,256], index: 2, kind: input, shape index: {}]
  %s3 = inlined_call_operand.hbm [shape: bf16[256,512], index: 3, kind: input, shape index: {}]
  %s4 = inlined_call_operand.vmem [shape: f32[1,512], index: 4, kind: input, shape index: {}]
  %s5 = inlined_call_operand.hbm [shape: bf16[512,256], index: 5, kind: input, shape index: {}]
  %s6 = inlined_call_operand.vmem [shape: f32[1,256], index: 6, kind: input, shape index: {}]
  %s7 = inlined_call_operand.hbm [shape: f32[256,128], index: 7, kind: input, shape index: {}]
  %s8 = inlined_call_operand.vmem [shape: f32[1,128], index: 8, kind: input, shape index: {}]
  %s9 = inlined_call_operand.hbm [shape: f32[8,128], index: 9, kind: output, shape index: {}]
  %s10 = sld [smem:[#allocation0]]
  $region66: #{tpu_custom_call.1} parent=0
    _
  %s12 = ssub.s32 1, %s10
  %s13 = scalar_select 0, %s12, %s10
  $region1: #{tpu_custom_call.1} parent=0
    #allocation2 [shape = 'u8[4096]{0}', space=vmem, size = 0x1000, scoped, tag = 'input window, operand 0, single buffered']
    #allocation3 [shape = 's32[1]{0}', space=sflag, size = 0x4, scoped, tag = 'scoped memory for tpu_custom_call.1']
    #allocation4 [shape = 's32[1]{0}', space=sflag, size = 0x4, scoped, tag = 'scoped memory for tpu_custom_call.1']
    #allocation5 [shape = 'u8[8192]{0}', space=vmem, size = 0x2000, scoped, tag = 'input window, operand 1, single buffered']
    #allocation6 [shape = 's32[1]{0}', space=sflag, size = 0x4, scoped, tag = 'scoped memory for tpu_custom_call.1']
    #allocation7 [shape = 'u8[262144]{0}', space=vmem, size = 0x40000, scoped, tag = 'input window, operand 3, single buffered']
    #allocation8 [shape = 'u8[262144]{0}', space=vmem, size = 0x40000, scoped, tag = 'input window, operand 5, single buffered']
    #allocation9 [shape = 's32[1]{0}', space=sflag, size = 0x4, scoped, tag = 'scoped memory for tpu_custom_call.1']
    #allocation10 [shape = 'u8[131072]{0}', space=vmem, size = 0x20000, scoped, tag = 'input window, operand 7, single buffered']
    #allocation11 [shape = 'u8[4096]{0}', space=vmem, size = 0x1000, scoped, tag = 'output window, operand 0, single buffered']
    %14 = vsyncpa [#allocation3], 0
    %15 = vsyncpa [#allocation6], 0
    %16 = vsyncpa [#allocation9], 0
    %17 = vsyncpa [#allocation4], 0
    // Predicated region
    $region2: #{tpu_custom_call.1} parent=1 // pred_check
      _
    $region3: #{tpu_custom_call.1} parent=1 // pred_check_branch
      %19 = sbr.rel (0) target = $region5
    $region4: #{tpu_custom_call.1} parent=1 // pred_region
      %s21 = ssub.s32 128, 128
      %22 = vsyncadd [#allocation3], %s21
      %s24 = sshll.u32 [#allocation2], 4
      %s25 = int_to_ptr.vmem [resolvable:$true] %s24
      %27 = dma.hbm_to_vmem [thread:$0]  %s0, 128, %s25, [#allocation3]
    $region5: #{tpu_custom_call.1} parent=1 // pred_fallthru
      _
    // Predicated region
    $region6: #{tpu_custom_call.1} parent=1 // pred_check
      _
    $region7: #{tpu_custom_call.1} parent=1 // pred_check_branch
      %29 = sbr.rel (0) target = $region9
    $region8: #{tpu_custom_call.1} parent=1 // pred_region
      %s31 = ssub.s32 256, 256
      %32 = vsyncadd [#allocation6], %s31
      %s34 = sshll.u32 [#allocation5], 4
      %s35 = int_to_ptr.vmem [resolvable:$true] %s34
      %37 = dma.hbm_to_vmem [thread:$0]  %s1, 256, %s35, [#allocation6]
    $region9: #{tpu_custom_call.1} parent=1 // pred_fallthru
      _
    // Predicated region
    $region10: #{tpu_custom_call.1} parent=1 // pred_check
      _
    $region11: #{tpu_custom_call.1} parent=1 // pred_check_branch
      %39 = sbr.rel (0) target = $region13
    $region12: #{tpu_custom_call.1} parent=1 // pred_region
      _
    $region13: #{tpu_custom_call.1} parent=1 // pred_fallthru
      _
    // Predicated region
    $region14: #{tpu_custom_call.1} parent=1 // pred_check
      _
    $region15: #{tpu_custom_call.1} parent=1 // pred_check_branch
      %41 = sbr.rel (0) target = $region17
    $region16: #{tpu_custom_call.1} parent=1 // pred_region
      %s43 = ssub.s32 8192, 8192
      %44 = vsyncadd [#allocation6], %s43
      %s45 = sshll.u32 [#allocation7], 4
      %s46 = int_to_ptr.vmem [resolvable:$true] %s45
      %51 = dma.hbm_to_vmem [thread:$0]  %s3, 8192, %s46, [#allocation6], 256, 256, 16
    $region17: #{tpu_custom_call.1} parent=1 // pred_fallthru
      _
    // Predicated region
    $region18: #{tpu_custom_call.1} parent=1 // pred_check
      _
    $region19: #{tpu_custom_call.1} parent=1 // pred_check_branch
      %53 = sbr.rel (0) target = $region21
    $region20: #{tpu_custom_call.1} parent=1 // pred_region
      _
    $region21: #{tpu_custom_call.1} parent=1 // pred_fallthru
      _
    // Predicated region
    $region22: #{tpu_custom_call.1} parent=1 // pred_check
      _
    $region23: #{tpu_custom_call.1} parent=1 // pred_check_branch
      %55 = sbr.rel (0) target = $region25
    $region24: #{tpu_custom_call.1} parent=1 // pred_region
      %s57 = ssub.s32 8192, 8192
      %58 = vsyncadd [#allocation9], %s57
      %s59 = sshll.u32 [#allocation8], 4
      %s60 = int_to_ptr.vmem [resolvable:$true] %s59
      %65 = dma.hbm_to_vmem [thread:$0]  %s5, 8192, %s60, [#allocation9], 128, 128, 8
    $region25: #{tpu_custom_call.1} parent=1 // pred_fallthru
      _
    // Predicated region
    $region26: #{tpu_custom_call.1} parent=1 // pred_check
      _
    $region27: #{tpu_custom_call.1} parent=1 // pred_check_branch
      %67 = sbr.rel (0) target = $region29
    $region28: #{tpu_custom_call.1} parent=1 // pred_region
      _
    $region29: #{tpu_custom_call.1} parent=1 // pred_fallthru
      _
    // Predicated region
    $region30: #{tpu_custom_call.1} parent=1 // pred_check
      _
    $region31: #{tpu_custom_call.1} parent=1 // pred_check_branch
      %69 = sbr.rel (0) target = $region33
    $region32: #{tpu_custom_call.1} parent=1 // pred_region
      %s71 = ssub.s32 4096, 4096
      %72 = vsyncadd [#allocation9], %s71
      %s73 = sshll.u32 [#allocation10], 4
      %s74 = int_to_ptr.vmem [resolvable:$true] %s73
      %79 = dma.hbm_to_vmem [thread:$0]  %s7, 4096, %s74, [#allocation9], 128, 128, 8
    $region33: #{tpu_custom_call.1} parent=1 // pred_fallthru
      _
    // Predicated region
    $region34: #{tpu_custom_call.1} parent=1 // pred_check
      _
    $region35: #{tpu_custom_call.1} parent=1 // pred_check_branch
      %81 = sbr.rel (0) target = $region37
    $region36: #{tpu_custom_call.1} parent=1 // pred_region
      _
    $region37: #{tpu_custom_call.1} parent=1 // pred_fallthru
      _
    // Predicated region
    $region38: #{tpu_custom_call.1} parent=1 // pred_check
      _
    $region39: #{tpu_custom_call.1} parent=1 // pred_check_branch
      %83 = sbr.rel (0) target = $region41
    $region40: #{tpu_custom_call.1} parent=1 // pred_region
      %84 = dma.done [#allocation3], 128
    $region41: #{tpu_custom_call.1} parent=1 // pred_fallthru
      _
    // Predicated region
    $region42: #{tpu_custom_call.1} parent=1 // pred_check
      _
    $region43: #{tpu_custom_call.1} parent=1 // pred_check_branch
      %86 = sbr.rel (0) target = $region45
    $region44: #{tpu_custom_call.1} parent=1 // pred_region
      %87 = dma.done [#allocation6], 256
    $region45: #{tpu_custom_call.1} parent=1 // pred_fallthru
      _
    // Predicated region
    $region46: #{tpu_custom_call.1} parent=1 // pred_check
      _
    $region47: #{tpu_custom_call.1} parent=1 // pred_check_branch
      %89 = sbr.rel (0) target = $region49
    $region48: #{tpu_custom_call.1} parent=1 // pred_region
      %90 = dma.done [#allocation6], 8192
    $region49: #{tpu_custom_call.1} parent=1 // pred_fallthru
      _
    // Predicated region
    $region50: #{tpu_custom_call.1} parent=1 // pred_check
      _
    $region51: #{tpu_custom_call.1} parent=1 // pred_check_branch
      %92 = sbr.rel (0) target = $region53
    $region52: #{tpu_custom_call.1} parent=1 // pred_region
      %93 = dma.done [#allocation9], 8192
    $region53: #{tpu_custom_call.1} parent=1 // pred_fallthru
      _
    // Predicated region
    $region54: #{tpu_custom_call.1} parent=1 // pred_check
      _
    $region55: #{tpu_custom_call.1} parent=1 // pred_check_branch
      %95 = sbr.rel (0) target = $region57
    $region56: #{tpu_custom_call.1} parent=1 // pred_region
      %96 = dma.done [#allocation9], 4096
    $region57: #{tpu_custom_call.1} parent=1 // pred_fallthru
      _
    %v97 = vld [vmem:[#allocation2] sm:$0xff]
    %v98 = vld [vmem:[#allocation5] sm:$0xff]
    %v99 = vld [vmem:[#allocation5 + $0x8] sm:$0xff]
    %v100 = vld [vmem:[%s2] sm:$0x3]
    %v102 = vlaneseq
    %v103 = vshrl.u32 %v102, 7
    %v104 = vsub.s32 0, %v103
    %v105 = vrot.slane %v100, %v104
    %v106 = vlaneseq
    %v107 = vshrl.u32 %v106, 7
    %v108 = vsub.s32 1, %v107
    %v109 = vrot.slane %v100, %v108
    %vm112 = vcmask 64512
    %v114 = vsel %vm112, %v97, 0
    %116 = vmatprep.subr.mxu0 %v99
    %117 = vmatpush1.msra.mxu0 %v98
    %118 = vmatprep.subr.mxu0 0.0
    %119 = vmatpush1.msra.mxu0 0.0
    %120 = vmatprep.subr.mxu0 0.0
    %121 = vmatpush1.msra.mxu0 0.0
    %122 = vmatprep.subr.mxu0 0.0
    %123 = vmatpush1.msra.mxu0 0.0
    %124 = vmatprep.subr.mxu0 0.0
    %125 = vmatpush1.msra.mxu0 0.0
    %126 = vmatprep.subr.mxu0 0.0
    %127 = vmatpush1.msra.mxu0 0.0
    %128 = vmatprep.subr.mxu0 0.0
    %129 = vmatpush1.msra.mxu0 0.0
    %130 = vmatprep.subr.mxu0 0.0
    %131 = vmatpush1.msra.mxu0 0.0
    %132 = vmatprep.subr.mxu0 0.0
    %133 = vmatpush1.msra.mxu0 0.0
    %134 = vmatprep.subr.mxu0 0.0
    %135 = vmatpush1.msra.mxu0 0.0
    %136 = vmatprep.subr.mxu0 0.0
    %137 = vmatpush1.msra.mxu0 0.0
    %138 = vmatprep.subr.mxu0 0.0
    %139 = vmatpush1.msra.mxu0 0.0
    %140 = vmatprep.subr.mxu0 0.0
    %141 = vmatpush1.msra.mxu0 0.0
    %142 = vmatprep.subr.mxu0 0.0
    %143 = vmatpush1.msra.mxu0 0.0
    %144 = vmatprep.subr.mxu0 0.0
    %145 = vmatpush1.msra.mxu0 0.0
    %146 = vmatprep.subr.mxu0 0.0
    %147 = vmatpush1.msra.mxu0 0.0
    %148 = vmatprep.subr.mxu0 0.0
    %149 = vmatpush1.msra.mxu0 0.0
    %150 = vmatprep.subr.mxu0 0.0
    %151 = vmatpush1.msra.mxu0 0.0
    %152 = vmatprep.subr.mxu0 0.0
    %153 = vmatpush1.msra.mxu0 0.0
    %154 = vmatprep.subr.mxu0 0.0
    %155 = vmatpush1.msra.mxu0 0.0
    %156 = vmatprep.subr.mxu0 0.0
    %157 = vmatpush1.msra.mxu0 0.0
    %158 = vmatprep.subr.mxu0 0.0
    %159 = vmatpush1.msra.mxu0 0.0
    %160 = vmatprep.subr.mxu0 0.0
    %161 = vmatpush1.msra.mxu0 0.0
    %162 = vmatprep.subr.mxu0 0.0
    %163 = vmatpush1.msra.mxu0 0.0
    %164 = vmatprep.subr.mxu0 0.0
    %165 = vmatpush1.msra.mxu0 0.0
    %166 = vmatprep.subr.mxu0 0.0
    %167 = vmatpush1.msra.mxu0 0.0
    %168 = vmatprep.subr.mxu0 0.0
    %169 = vmatpush1.msra.mxu0 0.0
    %170 = vmatprep.subr.mxu0 0.0
    %171 = vmatpush1.msra.mxu0 0.0
    %172 = vmatprep.subr.mxu0 0.0
    %173 = vmatpush1.msra.mxu0 0.0
    %174 = vmatprep.subr.mxu0 0.0
    %175 = vmatpush1.msra.mxu0 0.0
    %176 = vmatprep.subr.mxu0 0.0
    %177 = vmatpush1.msra.mxu0 0.0
    %178 = vmatprep.subr.mxu0 0.0
    %179 = vmatpush1.msra.mxu0 0.0
    %180 = vmatprep.mubr.f32.mxu0 0.0
    %181 = vmatmul.mubr.f32.gmra.mrb[0].mxu0 %v114
    %v182 = vpop.f32.mrb[0].mxu0
    %v183 = vadd.f32 %v105, %v182
    %v184 = vpop.f32.mrb[0].mxu0
    %v185 = vadd.f32 %v109, %v184
    %186 = vdwg.mxu0
    %v187 = vmax.f32 %v183, 0.0
    %v188 = vmax.f32 %v185, 0.0
    %v189 = vpack.c.bf16 %v187, %v187
    %v190 = vpack.c.bf16 %v188, %v188
    %v191 = vld [vmem:[#allocation7] sm:$0xff]
    %v192 = vld [vmem:[#allocation7 + $0x8] sm:$0xff]
    %v193 = vld [vmem:[#allocation7 + $0x10] sm:$0xff]
    %v194 = vld [vmem:[#allocation7 + $0x18] sm:$0xff]
    %v195 = vld [vmem:[#allocation7 + $0x20] sm:$0xff]
    %v196 = vld [vmem:[#allocation7 + $0x28] sm:$0xff]
    %v197 = vld [vmem:[#allocation7 + $0x30] sm:$0xff]
    %v198 = vld [vmem:[#allocation7 + $0x38] sm:$0xff]
    %v199 = vld [vmem:[#allocation7 + $0x40] sm:$0xff]
    %v200 = vld [vmem:[#allocation7 + $0x48] sm:$0xff]
    %v201 = vld [vmem:[#allocation7 + $0x50] sm:$0xff]
    %v202 = vld [vmem:[#allocation7 + $0x58] sm:$0xff]
    %v203 = vld [vmem:[#allocation7 + $0x60] sm:$0xff]
    %v204 = vld [vmem:[#allocation7 + $0x68] sm:$0xff]
    %v205 = vld [vmem:[#allocation7 + $0x70] sm:$0xff]
    %v206 = vld [vmem:[#allocation7 + $0x78] sm:$0xff]
    %v207 = vld [vmem:[#allocation7 + $0x80] sm:$0xff]
    %v208 = vld [vmem:[#allocation7 + $0x88] sm:$0xff]
    %v209 = vld [vmem:[#allocation7 + $0x90] sm:$0xff]
    %v210 = vld [vmem:[#allocation7 + $0x98] sm:$0xff]
    %v211 = vld [vmem:[#allocation7 + $0xa0] sm:$0xff]
    %v212 = vld [vmem:[#allocation7 + $0xa8] sm:$0xff]
    %v213 = vld [vmem:[#allocation7 + $0xb0] sm:$0xff]
    %v214 = vld [vmem:[#allocation7 + $0xb8] sm:$0xff]
    %v215 = vld [vmem:[#allocation7 + $0xc0] sm:$0xff]
    %v216 = vld [vmem:[#allocation7 + $0xc8] sm:$0xff]
    %v217 = vld [vmem:[#allocation7 + $0xd0] sm:$0xff]
    %v218 = vld [vmem:[#allocation7 + $0xd8] sm:$0xff]
    %v219 = vld [vmem:[#allocation7 + $0xe0] sm:$0xff]
    %v220 = vld [vmem:[#allocation7 + $0xe8] sm:$0xff]
    %v221 = vld [vmem:[#allocation7 + $0xf0] sm:$0xff]
    %v222 = vld [vmem:[#allocation7 + $0xf8] sm:$0xff]
    %v223 = vld [vmem:[#allocation7 + $0x100] sm:$0xff]
    %v224 = vld [vmem:[#allocation7 + $0x108] sm:$0xff]
    %v225 = vld [vmem:[#allocation7 + $0x110] sm:$0xff]
    %v226 = vld [vmem:[#allocation7 + $0x118] sm:$0xff]
    %v227 = vld [vmem:[#allocation7 + $0x120] sm:$0xff]
    %v228 = vld [vmem:[#allocation7 + $0x128] sm:$0xff]
    %v229 = vld [vmem:[#allocation7 + $0x130] sm:$0xff]
    %v230 = vld [vmem:[#allocation7 + $0x138] sm:$0xff]
    %v231 = vld [vmem:[#allocation7 + $0x140] sm:$0xff]
    %v232 = vld [vmem:[#allocation7 + $0x148] sm:$0xff]
    %v233 = vld [vmem:[#allocation7 + $0x150] sm:$0xff]
    %v234 = vld [vmem:[#allocation7 + $0x158] sm:$0xff]
    %v235 = vld [vmem:[#allocation7 + $0x160] sm:$0xff]
    %v236 = vld [vmem:[#allocation7 + $0x168] sm:$0xff]
    %v237 = vld [vmem:[#allocation7 + $0x170] sm:$0xff]
    %v238 = vld [vmem:[#allocation7 + $0x178] sm:$0xff]
    %v239 = vld [vmem:[#allocation7 + $0x180] sm:$0xff]
    %v240 = vld [vmem:[#allocation7 + $0x188] sm:$0xff]
    %v241 = vld [vmem:[#allocation7 + $0x190] sm:$0xff]
    %v242 = vld [vmem:[#allocation7 + $0x198] sm:$0xff]
    %v243 = vld [vmem:[#allocation7 + $0x1a0] sm:$0xff]
    %v244 = vld [vmem:[#allocation7 + $0x1a8] sm:$0xff]
    %v245 = vld [vmem:[#allocation7 + $0x1b0] sm:$0xff]
    %v246 = vld [vmem:[#allocation7 + $0x1b8] sm:$0xff]
    %v247 = vld [vmem:[#allocation7 + $0x1c0] sm:$0xff]
    %v248 = vld [vmem:[#allocation7 + $0x1c8] sm:$0xff]
    %v249 = vld [vmem:[#allocation7 + $0x1d0] sm:$0xff]
    %v250 = vld [vmem:[#allocation7 + $0x1d8] sm:$0xff]
    %v251 = vld [vmem:[#allocation7 + $0x1e0] sm:$0xff]
    %v252 = vld [vmem:[#allocation7 + $0x1e8] sm:$0xff]
    %v253 = vld [vmem:[#allocation7 + $0x1f0] sm:$0xff]
    %v254 = vld [vmem:[#allocation7 + $0x1f8] sm:$0xff]
    %v255 = vld [vmem:[%s4] sm:$0xf]
    %v257 = vlaneseq
    %v258 = vshrl.u32 %v257, 7
    %v259 = vsub.s32 0, %v258
    %v260 = vrot.slane %v255, %v259
    %v261 = vlaneseq
    %v262 = vshrl.u32 %v261, 7
    %v263 = vsub.s32 1, %v262
    %v264 = vrot.slane %v255, %v263
    %v265 = vlaneseq
    %v266 = vshrl.u32 %v265, 7
    %v267 = vsub.s32 2, %v266
    %v268 = vrot.slane %v255, %v267
    %v269 = vlaneseq
    %v270 = vshrl.u32 %v269, 7
    %v271 = vsub.s32 3, %v270
    %v272 = vrot.slane %v255, %v271
    %v341 = vunpack.c.l.b16 %v191
    %v342 = vunpack.c.h.b16 %v191
    %v343 = vunpack.c.l.b16 %v192
    %v344 = vunpack.c.h.b16 %v192
    %v345 = vunpack.c.l.b16 %v193
    %v346 = vunpack.c.h.b16 %v193
    %v347 = vunpack.c.l.b16 %v194
    %v348 = vunpack.c.h.b16 %v194
    %v349 = vunpack.c.l.b16 %v195
    %v350 = vunpack.c.h.b16 %v195
    %v351 = vunpack.c.l.b16 %v196
    %v352 = vunpack.c.h.b16 %v196
    %v353 = vunpack.c.l.b16 %v197
    %v354 = vunpack.c.h.b16 %v197
    %v355 = vunpack.c.l.b16 %v198
    %v356 = vunpack.c.h.b16 %v198
    %v357 = vunpack.c.l.b16 %v199
    %v358 = vunpack.c.h.b16 %v199
    %v359 = vunpack.c.l.b16 %v200
    %v360 = vunpack.c.h.b16 %v200
    %v361 = vunpack.c.l.b16 %v201
    %v362 = vunpack.c.h.b16 %v201
    %v363 = vunpack.c.l.b16 %v202
    %v364 = vunpack.c.h.b16 %v202
    %v365 = vunpack.c.l.b16 %v203
    %v366 = vunpack.c.h.b16 %v203
    %v367 = vunpack.c.l.b16 %v204
    %v368 = vunpack.c.h.b16 %v204
    %v369 = vunpack.c.l.b16 %v205
    %v370 = vunpack.c.h.b16 %v205
    %v371 = vunpack.c.l.b16 %v206
    %v372 = vunpack.c.h.b16 %v206
    %v373 = vunpack.c.l.b16 %v207
    %v374 = vunpack.c.h.b16 %v207
    %v375 = vunpack.c.l.b16 %v208
    %v376 = vunpack.c.h.b16 %v208
    %v377 = vunpack.c.l.b16 %v209
    %v378 = vunpack.c.h.b16 %v209
    %v379 = vunpack.c.l.b16 %v210
    %v380 = vunpack.c.h.b16 %v210
    %v381 = vunpack.c.l.b16 %v211
    %v382 = vunpack.c.h.b16 %v211
    %v383 = vunpack.c.l.b16 %v212
    %v384 = vunpack.c.h.b16 %v212
    %v385 = vunpack.c.l.b16 %v213
    %v386 = vunpack.c.h.b16 %v213
    %v387 = vunpack.c.l.b16 %v214
    %v388 = vunpack.c.h.b16 %v214
    %v389 = vunpack.c.l.b16 %v215
    %v390 = vunpack.c.h.b16 %v215
    %v391 = vunpack.c.l.b16 %v216
    %v392 = vunpack.c.h.b16 %v216
    %v393 = vunpack.c.l.b16 %v217
    %v394 = vunpack.c.h.b16 %v217
    %v395 = vunpack.c.l.b16 %v218
    %v396 = vunpack.c.h.b16 %v218
    %v397 = vunpack.c.l.b16 %v219
    %v398 = vunpack.c.h.b16 %v219
    %v399 = vunpack.c.l.b16 %v220
    %v400 = vunpack.c.h.b16 %v220
    %v401 = vunpack.c.l.b16 %v221
    %v402 = vunpack.c.h.b16 %v221
    %v403 = vunpack.c.l.b16 %v222
    %v404 = vunpack.c.h.b16 %v222
    %v405 = vunpack.c.l.b16 %v223
    %v406 = vunpack.c.h.b16 %v223
    %v407 = vunpack.c.l.b16 %v224
    %v408 = vunpack.c.h.b16 %v224
    %v409 = vunpack.c.l.b16 %v225
    %v410 = vunpack.c.h.b16 %v225
    %v411 = vunpack.c.l.b16 %v226
    %v412 = vunpack.c.h.b16 %v226
    %v413 = vunpack.c.l.b16 %v227
    %v414 = vunpack.c.h.b16 %v227
    %v415 = vunpack.c.l.b16 %v228
    %v416 = vunpack.c.h.b16 %v228
    %v417 = vunpack.c.l.b16 %v229
    %v418 = vunpack.c.h.b16 %v229
    %v419 = vunpack.c.l.b16 %v230
    %v420 = vunpack.c.h.b16 %v230
    %v421 = vunpack.c.l.b16 %v231
    %v422 = vunpack.c.h.b16 %v231
    %v423 = vunpack.c.l.b16 %v232
    %v424 = vunpack.c.h.b16 %v232
    %v425 = vunpack.c.l.b16 %v233
    %v426 = vunpack.c.h.b16 %v233
    %v427 = vunpack.c.l.b16 %v234
    %v428 = vunpack.c.h.b16 %v234
    %v429 = vunpack.c.l.b16 %v235
    %v430 = vunpack.c.h.b16 %v235
    %v431 = vunpack.c.l.b16 %v236
    %v432 = vunpack.c.h.b16 %v236
    %v433 = vunpack.c.l.b16 %v237
    %v434 = vunpack.c.h.b16 %v237
    %v435 = vunpack.c.l.b16 %v238
    %v436 = vunpack.c.h.b16 %v238
    %v437 = vunpack.c.l.b16 %v239
    %v438 = vunpack.c.h.b16 %v239
    %v439 = vunpack.c.l.b16 %v240
    %v440 = vunpack.c.h.b16 %v240
    %v441 = vunpack.c.l.b16 %v241
    %v442 = vunpack.c.h.b16 %v241
    %v443 = vunpack.c.l.b16 %v242
    %v444 = vunpack.c.h.b16 %v242
    %v445 = vunpack.c.l.b16 %v243
    %v446 = vunpack.c.h.b16 %v243
    %v447 = vunpack.c.l.b16 %v244
    %v448 = vunpack.c.h.b16 %v244
    %v449 = vunpack.c.l.b16 %v245
    %v450 = vunpack.c.h.b16 %v245
    %v451 = vunpack.c.l.b16 %v246
    %v452 = vunpack.c.h.b16 %v246
    %v453 = vunpack.c.l.b16 %v247
    %v454 = vunpack.c.h.b16 %v247
    %v455 = vunpack.c.l.b16 %v248
    %v456 = vunpack.c.h.b16 %v248
    %v457 = vunpack.c.l.b16 %v249
    %v458 = vunpack.c.h.b16 %v249
    %v459 = vunpack.c.l.b16 %v250
    %v460 = vunpack.c.h.b16 %v250
    %v461 = vunpack.c.l.b16 %v251
    %v462 = vunpack.c.h.b16 %v251
    %v463 = vunpack.c.l.b16 %v252
    %v464 = vunpack.c.h.b16 %v252
    %v465 = vunpack.c.l.b16 %v253
    %v466 = vunpack.c.h.b16 %v253
    %v467 = vunpack.c.l.b16 %v254
    %v468 = vunpack.c.h.b16 %v254
    %v469 = vpack.c.b16 %v345, %v341
    %v470 = vpack.c.b16 %v346, %v342
    %v471 = vpack.c.b16 %v347, %v343
    %v472 = vpack.c.b16 %v348, %v344
    %v473 = vpack.c.b16 %v353, %v349
    %v474 = vpack.c.b16 %v354, %v350
    %v475 = vpack.c.b16 %v355, %v351
    %v476 = vpack.c.b16 %v356, %v352
    %v477 = vpack.c.b16 %v361, %v357
    %v478 = vpack.c.b16 %v362, %v358
    %v479 = vpack.c.b16 %v363, %v359
    %v480 = vpack.c.b16 %v364, %v360
    %v481 = vpack.c.b16 %v369, %v365
    %v482 = vpack.c.b16 %v370, %v366
    %v483 = vpack.c.b16 %v371, %v367
    %v484 = vpack.c.b16 %v372, %v368
    %v485 = vpack.c.b16 %v377, %v373
    %v486 = vpack.c.b16 %v378, %v374
    %v487 = vpack.c.b16 %v379, %v375
    %v488 = vpack.c.b16 %v380, %v376
    %v489 = vpack.c.b16 %v385, %v381
    %v490 = vpack.c.b16 %v386, %v382
    %v491 = vpack.c.b16 %v387, %v383
    %v492 = vpack.c.b16 %v388, %v384
    %v493 = vpack.c.b16 %v393, %v389
    %v494 = vpack.c.b16 %v394, %v390
    %v495 = vpack.c.b16 %v395, %v391
    %v496 = vpack.c.b16 %v396, %v392
    %v497 = vpack.c.b16 %v401, %v397
    %v498 = vpack.c.b16 %v402, %v398
    %v499 = vpack.c.b16 %v403, %v399
    %v500 = vpack.c.b16 %v404, %v400
    %v501 = vpack.c.b16 %v409, %v405
    %v502 = vpack.c.b16 %v410, %v406
    %v503 = vpack.c.b16 %v411, %v407
    %v504 = vpack.c.b16 %v412, %v408
    %v505 = vpack.c.b16 %v417, %v413
    %v506 = vpack.c.b16 %v418, %v414
    %v507 = vpack.c.b16 %v419, %v415
    %v508 = vpack.c.b16 %v420, %v416
    %v509 = vpack.c.b16 %v425, %v421
    %v510 = vpack.c.b16 %v426, %v422
    %v511 = vpack.c.b16 %v427, %v423
    %v512 = vpack.c.b16 %v428, %v424
    %v513 = vpack.c.b16 %v433, %v429
    %v514 = vpack.c.b16 %v434, %v430
    %v515 = vpack.c.b16 %v435, %v431
    %v516 = vpack.c.b16 %v436, %v432
    %v517 = vpack.c.b16 %v441, %v437
    %v518 = vpack.c.b16 %v442, %v438
    %v519 = vpack.c.b16 %v443, %v439
    %v520 = vpack.c.b16 %v444, %v440
    %v521 = vpack.c.b16 %v449, %v445
    %v522 = vpack.c.b16 %v450, %v446
    %v523 = vpack.c.b16 %v451, %v447
    %v524 = vpack.c.b16 %v452, %v448
    %v525 = vpack.c.b16 %v457, %v453
    %v526 = vpack.c.b16 %v458, %v454
    %v527 = vpack.c.b16 %v459, %v455
    %v528 = vpack.c.b16 %v460, %v456
    %v529 = vpack.c.b16 %v465, %v461
    %v530 = vpack.c.b16 %v466, %v462
    %v531 = vpack.c.b16 %v467, %v463
    %v532 = vpack.c.b16 %v468, %v464
    %597 = vmatprep.subr.bf16.mxu0 %v470
    %598 = vmatpush1.bf16.msra.mxu0 %v469
    %599 = vmatprep.subr.bf16.mxu0 %v474
    %600 = vmatpush1.bf16.msra.mxu0 %v473
    %601 = vmatprep.subr.bf16.mxu0 %v478
    %602 = vmatpush1.bf16.msra.mxu0 %v477
    %603 = vmatprep.subr.bf16.mxu0 %v482
    %604 = vmatpush1.bf16.msra.mxu0 %v481
    %605 = vmatprep.subr.bf16.mxu0 %v486
    %606 = vmatpush1.bf16.msra.mxu0 %v485
    %607 = vmatprep.subr.bf16.mxu0 %v490
    %608 = vmatpush1.bf16.msra.mxu0 %v489
    %609 = vmatprep.subr.bf16.mxu0 %v494
    %610 = vmatpush1.bf16.msra.mxu0 %v493
    %611 = vmatprep.subr.bf16.mxu0 %v498
    %612 = vmatpush1.bf16.msra.mxu0 %v497
    %613 = vmatprep.subr.bf16.mxu0 %v502
    %614 = vmatpush1.bf16.msra.mxu0 %v501
    %615 = vmatprep.subr.bf16.mxu0 %v506
    %616 = vmatpush1.bf16.msra.mxu0 %v505
    %617 = vmatprep.subr.bf16.mxu0 %v510
    %618 = vmatpush1.bf16.msra.mxu0 %v509
    %619 = vmatprep.subr.bf16.mxu0 %v514
    %620 = vmatpush1.bf16.msra.mxu0 %v513
    %621 = vmatprep.subr.bf16.mxu0 %v518
    %622 = vmatpush1.bf16.msra.mxu0 %v517
    %623 = vmatprep.subr.bf16.mxu0 %v522
    %624 = vmatpush1.bf16.msra.mxu0 %v521
    %625 = vmatprep.subr.bf16.mxu0 %v526
    %626 = vmatpush1.bf16.msra.mxu0 %v525
    %627 = vmatprep.subr.bf16.mxu0 %v530
    %628 = vmatpush1.bf16.msra.mxu0 %v529
    %629 = vmatprep.mubr.bf16.mxu0 %v190
    %630 = vmatmul.mubr.bf16.gmra.mrb[0].mxu0 %v189
    %v631 = vpop.f32.mrb[0].mxu0
    %v632 = vadd.f32 %v260, %v631
    %v633 = vpop.f32.mrb[0].mxu0
    %v634 = vadd.f32 %v264, %v633
    %v635 = vpop.f32.mrb[0].mxu0
    %v636 = vpop.f32.mrb[0].mxu0
    %637 = vdwg.mxu0
    %638 = vmatprep.subr.bf16.mxu0 %v472
    %639 = vmatpush1.bf16.msra.mxu0 %v471
    %640 = vmatprep.subr.bf16.mxu0 %v476
    %641 = vmatpush1.bf16.msra.mxu0 %v475
    %642 = vmatprep.subr.bf16.mxu0 %v480
    %643 = vmatpush1.bf16.msra.mxu0 %v479
    %644 = vmatprep.subr.bf16.mxu0 %v484
    %645 = vmatpush1.bf16.msra.mxu0 %v483
    %646 = vmatprep.subr.bf16.mxu0 %v488
    %647 = vmatpush1.bf16.msra.mxu0 %v487
    %648 = vmatprep.subr.bf16.mxu0 %v492
    %649 = vmatpush1.bf16.msra.mxu0 %v491
    %650 = vmatprep.subr.bf16.mxu0 %v496
    %651 = vmatpush1.bf16.msra.mxu0 %v495
    %652 = vmatprep.subr.bf16.mxu0 %v500
    %653 = vmatpush1.bf16.msra.mxu0 %v499
    %654 = vmatprep.subr.bf16.mxu0 %v504
    %655 = vmatpush1.bf16.msra.mxu0 %v503
    %656 = vmatprep.subr.bf16.mxu0 %v508
    %657 = vmatpush1.bf16.msra.mxu0 %v507
    %658 = vmatprep.subr.bf16.mxu0 %v512
    %659 = vmatpush1.bf16.msra.mxu0 %v511
    %660 = vmatprep.subr.bf16.mxu0 %v516
    %661 = vmatpush1.bf16.msra.mxu0 %v515
    %662 = vmatprep.subr.bf16.mxu0 %v520
    %663 = vmatpush1.bf16.msra.mxu0 %v519
    %664 = vmatprep.subr.bf16.mxu0 %v524
    %665 = vmatpush1.bf16.msra.mxu0 %v523
    %666 = vmatprep.subr.bf16.mxu0 %v528
    %667 = vmatpush1.bf16.msra.mxu0 %v527
    %668 = vmatprep.subr.bf16.mxu0 %v532
    %669 = vmatpush1.bf16.msra.mxu0 %v531
    %670 = vmatprep.mubr.bf16.mxu0 %v190
    %671 = vmatmul.mubr.bf16.gmra.mrb[0].mxu0 %v189
    %v672 = vpop.f32.mrb[0].mxu0
    %v673 = vadd.f32 %v268, %v672
    %v674 = vpop.f32.mrb[0].mxu0
    %v675 = vadd.f32 %v272, %v674
    %v676 = vpop.f32.mrb[0].mxu0
    %v677 = vpop.f32.mrb[0].mxu0
    %678 = vdwg.mxu0
    %v679 = vmax.f32 %v632, 0.0
    %v680 = vmax.f32 %v634, 0.0
    %v681 = vmax.f32 %v673, 0.0
    %v682 = vmax.f32 %v675, 0.0
    %v683 = vpack.c.bf16 %v679, %v679
    %v684 = vpack.c.bf16 %v680, %v680
    %v685 = vpack.c.bf16 %v681, %v681
    %v686 = vpack.c.bf16 %v682, %v682
    %v687 = vld [vmem:[#allocation8] sm:$0xff]
    %v688 = vld [vmem:[#allocation8 + $0x8] sm:$0xff]
    %v689 = vld [vmem:[#allocation8 + $0x10] sm:$0xff]
    %v690 = vld [vmem:[#allocation8 + $0x18] sm:$0xff]
    %v691 = vld [vmem:[#allocation8 + $0x20] sm:$0xff]
    %v692 = vld [vmem:[#allocation8 + $0x28] sm:$0xff]
    %v693 = vld [vmem:[#allocation8 + $0x30] sm:$0xff]
    %v694 = vld [vmem:[#allocation8 + $0x38] sm:$0xff]
    %v695 = vld [vmem:[#allocation8 + $0x40] sm:$0xff]
    %v696 = vld [vmem:[#allocation8 + $0x48] sm:$0xff]
    %v697 = vld [vmem:[#allocation8 + $0x50] sm:$0xff]
    %v698 = vld [vmem:[#allocation8 + $0x58] sm:$0xff]
    %v699 = vld [vmem:[#allocation8 + $0x60] sm:$0xff]
    %v700 = vld [vmem:[#allocation8 + $0x68] sm:$0xff]
    %v701 = vld [vmem:[#allocation8 + $0x70] sm:$0xff]
    %v702 = vld [vmem:[#allocation8 + $0x78] sm:$0xff]
    %v703 = vld [vmem:[#allocation8 + $0x80] sm:$0xff]
    %v704 = vld [vmem:[#allocation8 + $0x88] sm:$0xff]
    %v705 = vld [vmem:[#allocation8 + $0x90] sm:$0xff]
    %v706 = vld [vmem:[#allocation8 + $0x98] sm:$0xff]
    %v707 = vld [vmem:[#allocation8 + $0xa0] sm:$0xff]
    %v708 = vld [vmem:[#allocation8 + $0xa8] sm:$0xff]
    %v709 = vld [vmem:[#allocation8 + $0xb0] sm:$0xff]
    %v710 = vld [vmem:[#allocation8 + $0xb8] sm:$0xff]
    %v711 = vld [vmem:[#allocation8 + $0xc0] sm:$0xff]
    %v712 = vld [vmem:[#allocation8 + $0xc8] sm:$0xff]
    %v713 = vld [vmem:[#allocation8 + $0xd0] sm:$0xff]
    %v714 = vld [vmem:[#allocation8 + $0xd8] sm:$0xff]
    %v715 = vld [vmem:[#allocation8 + $0xe0] sm:$0xff]
    %v716 = vld [vmem:[#allocation8 + $0xe8] sm:$0xff]
    %v717 = vld [vmem:[#allocation8 + $0xf0] sm:$0xff]
    %v718 = vld [vmem:[#allocation8 + $0xf8] sm:$0xff]
    %v719 = vld [vmem:[#allocation8 + $0x100] sm:$0xff]
    %v720 = vld [vmem:[#allocation8 + $0x108] sm:$0xff]
    %v721 = vld [vmem:[#allocation8 + $0x110] sm:$0xff]
    %v722 = vld [vmem:[#allocation8 + $0x118] sm:$0xff]
    %v723 = vld [vmem:[#allocation8 + $0x120] sm:$0xff]
    %v724 = vld [vmem:[#allocation8 + $0x128] sm:$0xff]
    %v725 = vld [vmem:[#allocation8 + $0x130] sm:$0xff]
    %v726 = vld [vmem:[#allocation8 + $0x138] sm:$0xff]
    %v727 = vld [vmem:[#allocation8 + $0x140] sm:$0xff]
    %v728 = vld [vmem:[#allocation8 + $0x148] sm:$0xff]
    %v729 = vld [vmem:[#allocation8 + $0x150] sm:$0xff]
    %v730 = vld [vmem:[#allocation8 + $0x158] sm:$0xff]
    %v731 = vld [vmem:[#allocation8 + $0x160] sm:$0xff]
    %v732 = vld [vmem:[#allocation8 + $0x168] sm:$0xff]
    %v733 = vld [vmem:[#allocation8 + $0x170] sm:$0xff]
    %v734 = vld [vmem:[#allocation8 + $0x178] sm:$0xff]
    %v735 = vld [vmem:[#allocation8 + $0x180] sm:$0xff]
    %v736 = vld [vmem:[#allocation8 + $0x188] sm:$0xff]
    %v737 = vld [vmem:[#allocation8 + $0x190] sm:$0xff]
    %v738 = vld [vmem:[#allocation8 + $0x198] sm:$0xff]
    %v739 = vld [vmem:[#allocation8 + $0x1a0] sm:$0xff]
    %v740 = vld [vmem:[#allocation8 + $0x1a8] sm:$0xff]
    %v741 = vld [vmem:[#allocation8 + $0x1b0] sm:$0xff]
    %v742 = vld [vmem:[#allocation8 + $0x1b8] sm:$0xff]
    %v743 = vld [vmem:[#allocation8 + $0x1c0] sm:$0xff]
    %v744 = vld [vmem:[#allocation8 + $0x1c8] sm:$0xff]
    %v745 = vld [vmem:[#allocation8 + $0x1d0] sm:$0xff]
    %v746 = vld [vmem:[#allocation8 + $0x1d8] sm:$0xff]
    %v747 = vld [vmem:[#allocation8 + $0x1e0] sm:$0xff]
    %v748 = vld [vmem:[#allocation8 + $0x1e8] sm:$0xff]
    %v749 = vld [vmem:[#allocation8 + $0x1f0] sm:$0xff]
    %v750 = vld [vmem:[#allocation8 + $0x1f8] sm:$0xff]
    %v751 = vld [vmem:[%s6] sm:$0x3]
    %v753 = vlaneseq
    %v754 = vshrl.u32 %v753, 7
    %v755 = vsub.s32 0, %v754
    %v756 = vrot.slane %v751, %v755
    %v757 = vlaneseq
    %v758 = vshrl.u32 %v757, 7
    %v759 = vsub.s32 1, %v758
    %v760 = vrot.slane %v751, %v759
    %v827 = vunpack.c.l.b16 %v687
    %v828 = vunpack.c.h.b16 %v687
    %v829 = vunpack.c.l.b16 %v688
    %v830 = vunpack.c.h.b16 %v688
    %v831 = vunpack.c.l.b16 %v689
    %v832 = vunpack.c.h.b16 %v689
    %v833 = vunpack.c.l.b16 %v690
    %v834 = vunpack.c.h.b16 %v690
    %v835 = vunpack.c.l.b16 %v691
    %v836 = vunpack.c.h.b16 %v691
    %v837 = vunpack.c.l.b16 %v692
    %v838 = vunpack.c.h.b16 %v692
    %v839 = vunpack.c.l.b16 %v693
    %v840 = vunpack.c.h.b16 %v693
    %v841 = vunpack.c.l.b16 %v694
    %v842 = vunpack.c.h.b16 %v694
    %v843 = vunpack.c.l.b16 %v695
    %v844 = vunpack.c.h.b16 %v695
    %v845 = vunpack.c.l.b16 %v696
    %v846 = vunpack.c.h.b16 %v696
    %v847 = vunpack.c.l.b16 %v697
    %v848 = vunpack.c.h.b16 %v697
    %v849 = vunpack.c.l.b16 %v698
    %v850 = vunpack.c.h.b16 %v698
    %v851 = vunpack.c.l.b16 %v699
    %v852 = vunpack.c.h.b16 %v699
    %v853 = vunpack.c.l.b16 %v700
    %v854 = vunpack.c.h.b16 %v700
    %v855 = vunpack.c.l.b16 %v701
    %v856 = vunpack.c.h.b16 %v701
    %v857 = vunpack.c.l.b16 %v702
    %v858 = vunpack.c.h.b16 %v702
    %v859 = vunpack.c.l.b16 %v703
    %v860 = vunpack.c.h.b16 %v703
    %v861 = vunpack.c.l.b16 %v704
    %v862 = vunpack.c.h.b16 %v704
    %v863 = vunpack.c.l.b16 %v705
    %v864 = vunpack.c.h.b16 %v705
    %v865 = vunpack.c.l.b16 %v706
    %v866 = vunpack.c.h.b16 %v706
    %v867 = vunpack.c.l.b16 %v707
    %v868 = vunpack.c.h.b16 %v707
    %v869 = vunpack.c.l.b16 %v708
    %v870 = vunpack.c.h.b16 %v708
    %v871 = vunpack.c.l.b16 %v709
    %v872 = vunpack.c.h.b16 %v709
    %v873 = vunpack.c.l.b16 %v710
    %v874 = vunpack.c.h.b16 %v710
    %v875 = vunpack.c.l.b16 %v711
    %v876 = vunpack.c.h.b16 %v711
    %v877 = vunpack.c.l.b16 %v712
    %v878 = vunpack.c.h.b16 %v712
    %v879 = vunpack.c.l.b16 %v713
    %v880 = vunpack.c.h.b16 %v713
    %v881 = vunpack.c.l.b16 %v714
    %v882 = vunpack.c.h.b16 %v714
    %v883 = vunpack.c.l.b16 %v715
    %v884 = vunpack.c.h.b16 %v715
    %v885 = vunpack.c.l.b16 %v716
    %v886 = vunpack.c.h.b16 %v716
    %v887 = vunpack.c.l.b16 %v717
    %v888 = vunpack.c.h.b16 %v717
    %v889 = vunpack.c.l.b16 %v718
    %v890 = vunpack.c.h.b16 %v718
    %v891 = vunpack.c.l.b16 %v719
    %v892 = vunpack.c.h.b16 %v719
    %v893 = vunpack.c.l.b16 %v720
    %v894 = vunpack.c.h.b16 %v720
    %v895 = vunpack.c.l.b16 %v721
    %v896 = vunpack.c.h.b16 %v721
    %v897 = vunpack.c.l.b16 %v722
    %v898 = vunpack.c.h.b16 %v722
    %v899 = vunpack.c.l.b16 %v723
    %v900 = vunpack.c.h.b16 %v723
    %v901 = vunpack.c.l.b16 %v724
    %v902 = vunpack.c.h.b16 %v724
    %v903 = vunpack.c.l.b16 %v725
    %v904 = vunpack.c.h.b16 %v725
    %v905 = vunpack.c.l.b16 %v726
    %v906 = vunpack.c.h.b16 %v726
    %v907 = vunpack.c.l.b16 %v727
    %v908 = vunpack.c.h.b16 %v727
    %v909 = vunpack.c.l.b16 %v728
    %v910 = vunpack.c.h.b16 %v728
    %v911 = vunpack.c.l.b16 %v729
    %v912 = vunpack.c.h.b16 %v729
    %v913 = vunpack.c.l.b16 %v730
    %v914 = vunpack.c.h.b16 %v730
    %v915 = vunpack.c.l.b16 %v731
    %v916 = vunpack.c.h.b16 %v731
    %v917 = vunpack.c.l.b16 %v732
    %v918 = vunpack.c.h.b16 %v732
    %v919 = vunpack.c.l.b16 %v733
    %v920 = vunpack.c.h.b16 %v733
    %v921 = vunpack.c.l.b16 %v734
    %v922 = vunpack.c.h.b16 %v734
    %v923 = vunpack.c.l.b16 %v735
    %v924 = vunpack.c.h.b16 %v735
    %v925 = vunpack.c.l.b16 %v736
    %v926 = vunpack.c.h.b16 %v736
    %v927 = vunpack.c.l.b16 %v737
    %v928 = vunpack.c.h.b16 %v737
    %v929 = vunpack.c.l.b16 %v738
    %v930 = vunpack.c.h.b16 %v738
    %v931 = vunpack.c.l.b16 %v739
    %v932 = vunpack.c.h.b16 %v739
    %v933 = vunpack.c.l.b16 %v740
    %v934 = vunpack.c.h.b16 %v740
    %v935 = vunpack.c.l.b16 %v741
    %v936 = vunpack.c.h.b16 %v741
    %v937 = vunpack.c.l.b16 %v742
    %v938 = vunpack.c.h.b16 %v742
    %v939 = vunpack.c.l.b16 %v743
    %v940 = vunpack.c.h.b16 %v743
    %v941 = vunpack.c.l.b16 %v744
    %v942 = vunpack.c.h.b16 %v744
    %v943 = vunpack.c.l.b16 %v745
    %v944 = vunpack.c.h.b16 %v745
    %v945 = vunpack.c.l.b16 %v746
    %v946 = vunpack.c.h.b16 %v746
    %v947 = vunpack.c.l.b16 %v747
    %v948 = vunpack.c.h.b16 %v747
    %v949 = vunpack.c.l.b16 %v748
    %v950 = vunpack.c.h.b16 %v748
    %v951 = vunpack.c.l.b16 %v749
    %v952 = vunpack.c.h.b16 %v749
    %v953 = vunpack.c.l.b16 %v750
    %v954 = vunpack.c.h.b16 %v750
    %v955 = vpack.c.b16 %v829, %v827
    %v956 = vpack.c.b16 %v830, %v828
    %v957 = vpack.c.b16 %v833, %v831
    %v958 = vpack.c.b16 %v834, %v832
    %v959 = vpack.c.b16 %v837, %v835
    %v960 = vpack.c.b16 %v838, %v836
    %v961 = vpack.c.b16 %v841, %v839
    %v962 = vpack.c.b16 %v842, %v840
    %v963 = vpack.c.b16 %v845, %v843
    %v964 = vpack.c.b16 %v846, %v844
    %v965 = vpack.c.b16 %v849, %v847
    %v966 = vpack.c.b16 %v850, %v848
    %v967 = vpack.c.b16 %v853, %v851
    %v968 = vpack.c.b16 %v854, %v852
    %v969 = vpack.c.b16 %v857, %v855
    %v970 = vpack.c.b16 %v858, %v856
    %v971 = vpack.c.b16 %v861, %v859
    %v972 = vpack.c.b16 %v862, %v860
    %v973 = vpack.c.b16 %v865, %v863
    %v974 = vpack.c.b16 %v866, %v864
    %v975 = vpack.c.b16 %v869, %v867
    %v976 = vpack.c.b16 %v870, %v868
    %v977 = vpack.c.b16 %v873, %v871
    %v978 = vpack.c.b16 %v874, %v872
    %v979 = vpack.c.b16 %v877, %v875
    %v980 = vpack.c.b16 %v878, %v876
    %v981 = vpack.c.b16 %v881, %v879
    %v982 = vpack.c.b16 %v882, %v880
    %v983 = vpack.c.b16 %v885, %v883
    %v984 = vpack.c.b16 %v886, %v884
    %v985 = vpack.c.b16 %v889, %v887
    %v986 = vpack.c.b16 %v890, %v888
    %v987 = vpack.c.b16 %v893, %v891
    %v988 = vpack.c.b16 %v894, %v892
    %v989 = vpack.c.b16 %v897, %v895
    %v990 = vpack.c.b16 %v898, %v896
    %v991 = vpack.c.b16 %v901, %v899
    %v992 = vpack.c.b16 %v902, %v900
    %v993 = vpack.c.b16 %v905, %v903
    %v994 = vpack.c.b16 %v906, %v904
    %v995 = vpack.c.b16 %v909, %v907
    %v996 = vpack.c.b16 %v910, %v908
    %v997 = vpack.c.b16 %v913, %v911
    %v998 = vpack.c.b16 %v914, %v912
    %v999 = vpack.c.b16 %v917, %v915
    %v1000 = vpack.c.b16 %v918, %v916
    %v1001 = vpack.c.b16 %v921, %v919
    %v1002 = vpack.c.b16 %v922, %v920
    %v1003 = vpack.c.b16 %v925, %v923
    %v1004 = vpack.c.b16 %v926, %v924
    %v1005 = vpack.c.b16 %v929, %v927
    %v1006 = vpack.c.b16 %v930, %v928
    %v1007 = vpack.c.b16 %v933, %v931
    %v1008 = vpack.c.b16 %v934, %v932
    %v1009 = vpack.c.b16 %v937, %v935
    %v1010 = vpack.c.b16 %v938, %v936
    %v1011 = vpack.c.b16 %v941, %v939
    %v1012 = vpack.c.b16 %v942, %v940
    %v1013 = vpack.c.b16 %v945, %v943
    %v1014 = vpack.c.b16 %v946, %v944
    %v1015 = vpack.c.b16 %v949, %v947
    %v1016 = vpack.c.b16 %v950, %v948
    %v1017 = vpack.c.b16 %v953, %v951
    %v1018 = vpack.c.b16 %v954, %v952
    %1083 = vmatprep.subr.bf16.mxu0 %v956
    %1084 = vmatpush1.bf16.msra.mxu0 %v955
    %1085 = vmatprep.subr.bf16.mxu0 %v958
    %1086 = vmatpush1.bf16.msra.mxu0 %v957
    %1087 = vmatprep.subr.bf16.mxu0 %v960
    %1088 = vmatpush1.bf16.msra.mxu0 %v959
    %1089 = vmatprep.subr.bf16.mxu0 %v962
    %1090 = vmatpush1.bf16.msra.mxu0 %v961
    %1091 = vmatprep.subr.bf16.mxu0 %v964
    %1092 = vmatpush1.bf16.msra.mxu0 %v963
    %1093 = vmatprep.subr.bf16.mxu0 %v966
    %1094 = vmatpush1.bf16.msra.mxu0 %v965
    %1095 = vmatprep.subr.bf16.mxu0 %v968
    %1096 = vmatpush1.bf16.msra.mxu0 %v967
    %1097 = vmatprep.subr.bf16.mxu0 %v970
    %1098 = vmatpush1.bf16.msra.mxu0 %v969
    %1099 = vmatprep.subr.bf16.mxu0 %v972
    %1100 = vmatpush1.bf16.msra.mxu0 %v971
    %1101 = vmatprep.subr.bf16.mxu0 %v974
    %1102 = vmatpush1.bf16.msra.mxu0 %v973
    %1103 = vmatprep.subr.bf16.mxu0 %v976
    %1104 = vmatpush1.bf16.msra.mxu0 %v975
    %1105 = vmatprep.subr.bf16.mxu0 %v978
    %1106 = vmatpush1.bf16.msra.mxu0 %v977
    %1107 = vmatprep.subr.bf16.mxu0 %v980
    %1108 = vmatpush1.bf16.msra.mxu0 %v979
    %1109 = vmatprep.subr.bf16.mxu0 %v982
    %1110 = vmatpush1.bf16.msra.mxu0 %v981
    %1111 = vmatprep.subr.bf16.mxu0 %v984
    %1112 = vmatpush1.bf16.msra.mxu0 %v983
    %1113 = vmatprep.subr.bf16.mxu0 %v986
    %1114 = vmatpush1.bf16.msra.mxu0 %v985
    %1115 = vmatprep.mubr.bf16.mxu0 %v684
    %1116 = vmatmul.mubr.bf16.gmra.mrb[0].mxu0 %v683
    %v1117 = vpop.f32.mrb[0].mxu0
    %v1118 = vadd.f32 %v756, %v1117
    %v1119 = vpop.f32.mrb[0].mxu0
    %v1120 = vadd.f32 %v760, %v1119
    %v1121 = vpop.f32.mrb[0].mxu0
    %v1122 = vpop.f32.mrb[0].mxu0
    %1123 = vdwg.mxu0
    %1124 = vmatprep.subr.bf16.mxu0 %v988
    %1125 = vmatpush1.bf16.msra.mxu0 %v987
    %1126 = vmatprep.subr.bf16.mxu0 %v990
    %1127 = vmatpush1.bf16.msra.mxu0 %v989
    %1128 = vmatprep.subr.bf16.mxu0 %v992
    %1129 = vmatpush1.bf16.msra.mxu0 %v991
    %1130 = vmatprep.subr.bf16.mxu0 %v994
    %1131 = vmatpush1.bf16.msra.mxu0 %v993
    %1132 = vmatprep.subr.bf16.mxu0 %v996
    %1133 = vmatpush1.bf16.msra.mxu0 %v995
    %1134 = vmatprep.subr.bf16.mxu0 %v998
    %1135 = vmatpush1.bf16.msra.mxu0 %v997
    %1136 = vmatprep.subr.bf16.mxu0 %v1000
    %1137 = vmatpush1.bf16.msra.mxu0 %v999
    %1138 = vmatprep.subr.bf16.mxu0 %v1002
    %1139 = vmatpush1.bf16.msra.mxu0 %v1001
    %1140 = vmatprep.subr.bf16.mxu0 %v1004
    %1141 = vmatpush1.bf16.msra.mxu0 %v1003
    %1142 = vmatprep.subr.bf16.mxu0 %v1006
    %1143 = vmatpush1.bf16.msra.mxu0 %v1005
    %1144 = vmatprep.subr.bf16.mxu0 %v1008
    %1145 = vmatpush1.bf16.msra.mxu0 %v1007
    %1146 = vmatprep.subr.bf16.mxu0 %v1010
    %1147 = vmatpush1.bf16.msra.mxu0 %v1009
    %1148 = vmatprep.subr.bf16.mxu0 %v1012
    %1149 = vmatpush1.bf16.msra.mxu0 %v1011
    %1150 = vmatprep.subr.bf16.mxu0 %v1014
    %1151 = vmatpush1.bf16.msra.mxu0 %v1013
    %1152 = vmatprep.subr.bf16.mxu0 %v1016
    %1153 = vmatpush1.bf16.msra.mxu0 %v1015
    %1154 = vmatprep.subr.bf16.mxu0 %v1018
    %1155 = vmatpush1.bf16.msra.mxu0 %v1017
    %1156 = vmatprep.mubr.bf16.mxu0 %v686
    %1157 = vmatmul.mubr.bf16.gmra.mrb[0].mxu0 %v685
    %v1158 = vpop.f32.mrb[0].mxu0
    %v1159 = vadd.f32 %v1118, %v1158
    %v1160 = vpop.f32.mrb[0].mxu0
    %v1161 = vadd.f32 %v1120, %v1160
    %v1162 = vpop.f32.mrb[0].mxu0
    %v1163 = vpop.f32.mrb[0].mxu0
    %1164 = vdwg.mxu0
    %v1165 = vmax.f32 %v1159, 0.0
    %v1166 = vmax.f32 %v1161, 0.0
    %v1167 = vld [vmem:[#allocation10] sm:$0xff]
    %v1168 = vld [vmem:[#allocation10 + $0x8] sm:$0xff]
    %v1169 = vld [vmem:[#allocation10 + $0x10] sm:$0xff]
    %v1170 = vld [vmem:[#allocation10 + $0x18] sm:$0xff]
    %v1171 = vld [vmem:[#allocation10 + $0x20] sm:$0xff]
    %v1172 = vld [vmem:[#allocation10 + $0x28] sm:$0xff]
    %v1173 = vld [vmem:[#allocation10 + $0x30] sm:$0xff]
    %v1174 = vld [vmem:[#allocation10 + $0x38] sm:$0xff]
    %v1175 = vld [vmem:[#allocation10 + $0x40] sm:$0xff]
    %v1176 = vld [vmem:[#allocation10 + $0x48] sm:$0xff]
    %v1177 = vld [vmem:[#allocation10 + $0x50] sm:$0xff]
    %v1178 = vld [vmem:[#allocation10 + $0x58] sm:$0xff]
    %v1179 = vld [vmem:[#allocation10 + $0x60] sm:$0xff]
    %v1180 = vld [vmem:[#allocation10 + $0x68] sm:$0xff]
    %v1181 = vld [vmem:[#allocation10 + $0x70] sm:$0xff]
    %v1182 = vld [vmem:[#allocation10 + $0x78] sm:$0xff]
    %v1183 = vld [vmem:[#allocation10 + $0x80] sm:$0xff]
    %v1184 = vld [vmem:[#allocation10 + $0x88] sm:$0xff]
    %v1185 = vld [vmem:[#allocation10 + $0x90] sm:$0xff]
    %v1186 = vld [vmem:[#allocation10 + $0x98] sm:$0xff]
    %v1187 = vld [vmem:[#allocation10 + $0xa0] sm:$0xff]
    %v1188 = vld [vmem:[#allocation10 + $0xa8] sm:$0xff]
    %v1189 = vld [vmem:[#allocation10 + $0xb0] sm:$0xff]
    %v1190 = vld [vmem:[#allocation10 + $0xb8] sm:$0xff]
    %v1191 = vld [vmem:[#allocation10 + $0xc0] sm:$0xff]
    %v1192 = vld [vmem:[#allocation10 + $0xc8] sm:$0xff]
    %v1193 = vld [vmem:[#allocation10 + $0xd0] sm:$0xff]
    %v1194 = vld [vmem:[#allocation10 + $0xd8] sm:$0xff]
    %v1195 = vld [vmem:[#allocation10 + $0xe0] sm:$0xff]
    %v1196 = vld [vmem:[#allocation10 + $0xe8] sm:$0xff]
    %v1197 = vld [vmem:[#allocation10 + $0xf0] sm:$0xff]
    %v1198 = vld [vmem:[#allocation10 + $0xf8] sm:$0xff]
    %v1199 = vld [vmem:[%s8] sm:$0x1]
    %v1201 = vlaneseq
    %v1202 = vshrl.u32 %v1201, 7
    %v1203 = vsub.s32 0, %v1202
    %v1204 = vrot.slane %v1199, %v1203
    %1206 = vmatprep.subr.mxu0 0.0
    %1207 = vmatpush1.msra.mxu0 %v1167
    %1208 = vmatprep.subr.mxu0 0.0
    %1209 = vmatpush1.msra.mxu0 %v1168
    %1210 = vmatprep.subr.mxu0 0.0
    %1211 = vmatpush1.msra.mxu0 %v1169
    %1212 = vmatprep.subr.mxu0 0.0
    %1213 = vmatpush1.msra.mxu0 %v1170
    %1214 = vmatprep.subr.mxu0 0.0
    %1215 = vmatpush1.msra.mxu0 %v1171
    %1216 = vmatprep.subr.mxu0 0.0
    %1217 = vmatpush1.msra.mxu0 %v1172
    %1218 = vmatprep.subr.mxu0 0.0
    %1219 = vmatpush1.msra.mxu0 %v1173
    %1220 = vmatprep.subr.mxu0 0.0
    %1221 = vmatpush1.msra.mxu0 %v1174
    %1222 = vmatprep.subr.mxu0 0.0
    %1223 = vmatpush1.msra.mxu0 %v1175
    %1224 = vmatprep.subr.mxu0 0.0
    %1225 = vmatpush1.msra.mxu0 %v1176
    %1226 = vmatprep.subr.mxu0 0.0
    %1227 = vmatpush1.msra.mxu0 %v1177
    %1228 = vmatprep.subr.mxu0 0.0
    %1229 = vmatpush1.msra.mxu0 %v1178
    %1230 = vmatprep.subr.mxu0 0.0
    %1231 = vmatpush1.msra.mxu0 %v1179
    %1232 = vmatprep.subr.mxu0 0.0
    %1233 = vmatpush1.msra.mxu0 %v1180
    %1234 = vmatprep.subr.mxu0 0.0
    %1235 = vmatpush1.msra.mxu0 %v1181
    %1236 = vmatprep.subr.mxu0 0.0
    %1237 = vmatpush1.msra.mxu0 %v1182
    %1238 = vmatprep.subr.mxu0 0.0
    %1239 = vmatpush1.msra.mxu0 %v1183
    %1240 = vmatprep.subr.mxu0 0.0
    %1241 = vmatpush1.msra.mxu0 %v1184
    %1242 = vmatprep.subr.mxu0 0.0
    %1243 = vmatpush1.msra.mxu0 %v1185
    %1244 = vmatprep.subr.mxu0 0.0
    %1245 = vmatpush1.msra.mxu0 %v1186
    %1246 = vmatprep.subr.mxu0 0.0
    %1247 = vmatpush1.msra.mxu0 %v1187
    %1248 = vmatprep.subr.mxu0 0.0
    %1249 = vmatpush1.msra.mxu0 %v1188
    %1250 = vmatprep.subr.mxu0 0.0
    %1251 = vmatpush1.msra.mxu0 %v1189
    %1252 = vmatprep.subr.mxu0 0.0
    %1253 = vmatpush1.msra.mxu0 %v1190
    %1254 = vmatprep.subr.mxu0 0.0
    %1255 = vmatpush1.msra.mxu0 %v1191
    %1256 = vmatprep.subr.mxu0 0.0
    %1257 = vmatpush1.msra.mxu0 %v1192
    %1258 = vmatprep.subr.mxu0 0.0
    %1259 = vmatpush1.msra.mxu0 %v1193
    %1260 = vmatprep.subr.mxu0 0.0
    %1261 = vmatpush1.msra.mxu0 %v1194
    %1262 = vmatprep.subr.mxu0 0.0
    %1263 = vmatpush1.msra.mxu0 %v1195
    %1264 = vmatprep.subr.mxu0 0.0
    %1265 = vmatpush1.msra.mxu0 %v1196
    %1266 = vmatprep.subr.mxu0 0.0
    %1267 = vmatpush1.msra.mxu0 %v1197
    %1268 = vmatprep.subr.mxu0 0.0
    %1269 = vmatpush1.msra.mxu0 %v1198
    %1270 = vmatprep.mubr.f32.mxu0 %v1166
    %1271 = vmatmul.mubr.f32.gmra.mrb[0].mxu0 %v1165
    %v1272 = vpop.f32.mrb[0].mxu0
    %v1273 = vadd.f32 %v1204, %v1272
    %v1274 = vpop.f32.mrb[0].mxu0
    %1275 = vdwg.mxu0
    %1276 = vst [vmem:[#allocation11] sm:$0xff] %v1273
    // Predicated region
    $region58: #{tpu_custom_call.1} parent=1 // pred_check
      _
    $region59: #{tpu_custom_call.1} parent=1 // pred_check_branch
      %1278 = sbr.rel (0) target = $region61
    $region60: #{tpu_custom_call.1} parent=1 // pred_region
      %s1280 = ssub.s32 128, 128
      %1281 = vsyncadd [#allocation4], %s1280
      %s1283 = sshll.u32 [#allocation11], 4
      %s1284 = int_to_ptr.vmem [resolvable:$true] %s1283
      %1286 = dma.vmem_to_hbm [thread:$0]  %s1284, 128, %s9, [#allocation4]
    $region61: #{tpu_custom_call.1} parent=1 // pred_fallthru
      _
    // Predicated region
    $region62: #{tpu_custom_call.1} parent=1 // pred_check
      _
    $region63: #{tpu_custom_call.1} parent=1 // pred_check_branch
      %1288 = sbr.rel (0) target = $region65
    $region64: #{tpu_custom_call.1} parent=1 // pred_region
      %1289 = dma.done [#allocation4], 128
    $region65: #{tpu_custom_call.1} parent=1 // pred_fallthru
      _
    %1290 = vsyncpa [#allocation3], 1
    %1291 = vsyncpa [#allocation6], 1
    %1292 = vsyncpa [#allocation9], 1
    %1293 = vsyncpa [#allocation4], 1

</llo_original>
